<compile_context>
chip_gen: v5e
topology: v5e:2x2
jax: 0.10.0
libtpu: 0.0.40
codegen_flags: <defaults>
</compile_context>

<pallas_src>
import jax
import jax.numpy as jnp
from jax.experimental import pallas as pl
from jax.experimental.pallas import tpu as pltpu


def _round_up(n: int, m: int) -> int:
    return ((n + m - 1) // m) * m


def _mlp_density_kernel(x_ref, w1_ref, b1_ref, w2_ref, b2_ref, o_ref):
    # x_ref : [tB, F]   f32  (cast to bf16 in-kernel; no host pad/cast copy)
    # w1_ref: [F, HIDp] bf16 (VMEM-resident, constant index_map)
    # b1_ref: [1, HIDp] f32
    # w2_ref: [1, HIDp] f32  (second layer expressed as a row)
    # b2_ref: [1, 1]    f32  (SMEM scalar)
    # o_ref : [1, tB]   f32  (batch on the lane axis -> unmasked lane-dense store)
    x_bf16 = x_ref[...].astype(jnp.bfloat16)
    h = jnp.dot(x_bf16, w1_ref[...],
                preferred_element_type=jnp.float32)          # MXU, f32 accumulate
    h = jnp.maximum(h + b1_ref[...], 0.0)                    # ReLU epilogue in f32 (VPU)
    # Second "matmul" has N=1 -> VPU multiply + XLU lane-reduce instead of an
    # MXU pass with a 1-lane result.  Padded HID lanes are zero in b1/w2, so
    # they contribute exactly 0.
    z = jnp.sum(h * w2_ref[...], axis=-1) + b2_ref[0, 0]     # [tB]
    o_ref[...] = jax.nn.sigmoid(z).reshape(1, -1).astype(o_ref.dtype)


def _vmem_limit_bytes() -> int:
    # 64 MiB scoped limit on 128 MiB parts (v5e/v6e); 32 MiB otherwise (v7x /
    # unknown hardware).
    try:
        cap = getattr(pltpu.get_tpu_info(), "vmem_capacity_bytes", None)
        if cap is not None and cap >= 128 * 1024 * 1024:
            return 64 * 1024 * 1024
    except Exception:
        pass
    return 32 * 1024 * 1024


def gt_density_guide_forward(x, w1, b1, w2, b2, *, tile_b=1024):
    """prob = model(x); x: [B, H, T] float32 -> prob: [B, 1] float32."""
    B, H, T = x.shape
    F = H * T
    HID = w1.shape[1]
    HIDp = _round_up(max(HID, 128), 128)

    # ---- batch tiling -------------------------------------------------------
    # Small B: one exact tile (block dims equal the full array dims -> legal
    # even when not (8,128)-aligned; zero padded-batch waste).
    # Large B: >=2 lane-aligned tiles so the "parallel" grid axis feeds both
    # v7x TensorCores, sized to minimize B_pad.
    if B <= 256:
        tB, B_pad, nb = B, B, 1
    else:
        nb_target = max(2, pl.cdiv(B, tile_b))
        tB = min(_round_up(pl.cdiv(B, nb_target), 128), _round_up(tile_b, 128))
        B_pad = _round_up(B, tB)
        nb = B_pad // tB

    # ---- host-side prep (no x cast; pad x rows only if B % tB != 0) --------
    x_flat = x.reshape(B, F).astype(jnp.float32)
    if B_pad != B:
        x_flat = jnp.pad(x_flat, ((0, B_pad - B), (0, 0)))

    # Weights: one-time tiny copies.  K = F stays exact; only HID/N is padded.
    w1_p = jnp.zeros((F, HIDp), jnp.bfloat16).at[:, :HID].set(
        w1.astype(jnp.bfloat16))
    b1_p = jnp.zeros((1, HIDp), jnp.float32).at[:, :HID].set(
        b1.reshape(1, HID).astype(jnp.float32))
    w2_p = jnp.zeros((1, HIDp), jnp.float32).at[:, :HID].set(
        w2.reshape(1, HID).astype(jnp.float32))
    b2_s = b2.reshape(1, 1).astype(jnp.float32)

    vmem_limit = _vmem_limit_bytes()

    def build(single_buffer_weights):
        def const_spec(shape):
            kwargs = {}
            if single_buffer_weights and hasattr(pl, "Buffered"):
                # Constant-index blocks don't need double buffers; halve their
                # resident VMEM footprint (matters most on v7x's 64 MiB).
                kwargs["pipeline_mode"] = pl.Buffered(1)
            return pl.BlockSpec(shape, lambda i: (0, 0), **kwargs)

        return pl.pallas_call(
            _mlp_density_kernel,
            out_shape=jax.ShapeDtypeStruct((1, B_pad), jnp.float32),
            grid=(nb,),
            in_specs=[
                pl.BlockSpec((tB, F), lambda i: (i, 0)),       # x: pipelined over batch
                const_spec((F, HIDp)),                         # W1: VMEM-resident
                const_spec((1, HIDp)),                         # b1
                const_spec((1, HIDp)),                         # w2 row
                pl.BlockSpec(memory_space=pltpu.MemorySpace.SMEM),  # b2 scalar
            ],
            out_specs=pl.BlockSpec((1, tB), lambda i: (0, i)), # lane-dense output
            compiler_params=pltpu.CompilerParams(
                dimension_semantics=("parallel",),             # shard tiles across TCs
                vmem_limit_bytes=vmem_limit,
            ),
        )

    args = (x_flat, w1_p, b1_p, w2_p, b2_s)
    try:
        out = build(True)(*args)
    except Exception:
        # Fallback: default double-buffered weight blocks.
        out = build(False)(*args)

    return out[0, :B, None]  # [B, 1], matching the PyTorch module's output


def _reference_forward_f32(x, w1, b1, w2, b2):
    B = x.shape[0]
    x_flat = x.reshape(B, -1)
    h = jnp.maximum(x_flat @ w1 + b1, 0.0)
    return jax.nn.sigmoid(h @ w2 + b2)


def _reference_forward_bf16(x, w1, b1, w2, b2):
    # Matches the kernel's operand dtypes (bf16 MXU inputs, f32 accumulate/epilogue).
    B = x.shape[0]
    x_flat = x.reshape(B, -1).astype(jnp.bfloat16)
    h = jnp.dot(x_flat, w1.astype(jnp.bfloat16),
                preferred_element_type=jnp.float32) + b1
    h = jnp.maximum(h, 0.0)
    return jax.nn.sigmoid(h @ w2 + b2)


if __name__ == "__main__":
    key = jax.random.PRNGKey(0)
    k_x, k_w1, k_b1, k_w2, k_b2 = jax.random.split(key, 5)

    # Small shapes consistent with the module: [batch, horizon, transition_dim]
    B, H, T = 2, 8, 4
    HID = 32
    F = H * T

    x = jax.random.normal(k_x, (B, H, T), dtype=jnp.float32)

    # Deterministic synthetic parameters (Linear(F, HID) and Linear(HID, 1)).
    w1 = jax.random.normal(k_w1, (F, HID), dtype=jnp.float32) * 0.1
    b1 = jax.random.normal(k_b1, (1, HID), dtype=jnp.float32) * 0.1
    w2 = jax.random.normal(k_w2, (HID, 1), dtype=jnp.float32) * 0.1
    b2 = jax.random.normal(k_b2, (1, 1), dtype=jnp.float32) * 0.1

    prob = gt_density_guide_forward(x, w1, b1, w2, b2)
    jax.block_until_ready(prob)

    assert prob.shape == (B, 1), prob.shape
    ref_bf16 = _reference_forward_bf16(x, w1, b1, w2, b2)
    ref_f32 = _reference_forward_f32(x, w1, b1, w2, b2)
    assert jnp.allclose(prob, ref_bf16, atol=1e-4, rtol=1e-4), (prob, ref_bf16)
    assert jnp.allclose(prob, ref_f32, atol=1e-2, rtol=1e-2), (prob, ref_f32)

    # TODO(synk): the module's `gradients` method (autograd.grad of prob.sum()
    # w.r.t. x[:, :, 2:4]) maps to jax.grad around this wrapper and would need
    # a custom_vjp for the pallas_call; it is not an in-kernel op.

    print("KERNEL_OK")
</pallas_src>

<mosaic_0001>
module attributes {stable_mosaic.version = 11 : i64} {
  func.func @_mlp_density_kernel(%arg0: i32, %arg1: memref<2x32xf32, #tpu.memory_space<vmem>>, %arg2: memref<32x128xbf16, #tpu.memory_space<vmem>>, %arg3: memref<1x128xf32, #tpu.memory_space<vmem>>, %arg4: memref<1x128xf32, #tpu.memory_space<vmem>>, %arg5: memref<1x1xf32, #tpu.memory_space<smem>>, %arg6: memref<1x2xf32, #tpu.memory_space<vmem>>) attributes {dimension_semantics = [#tpu.dimension_semantics<parallel>], iteration_bounds = array<i64: 1>, scalar_prefetch = 0 : i64, scratch_operands = 0 : i64, tpu.core_type = #tpu.core_type<tc>, window_params = [{transform_indices = @transform_0, window_bounds = array<i64: 2, 32>}, {pipeline_mode = #tpu.pipeline_mode<synchronous>, transform_indices = @transform_1, window_bounds = array<i64: 32, 128>}, {pipeline_mode = #tpu.pipeline_mode<synchronous>, transform_indices = @transform_2, window_bounds = array<i64: 1, 128>}, {pipeline_mode = #tpu.pipeline_mode<synchronous>, transform_indices = @transform_3, window_bounds = array<i64: 1, 128>}, {transform_indices = @transform_4, window_bounds = array<i64: 1, 1>}, {transform_indices = @transform_5, window_bounds = array<i64: 1, 2>}]} {
    %c0 = arith.constant 0 : index
    %c0_0 = arith.constant 0 : index
    %0 = vector.load %arg1[%c0, %c0_0] : memref<2x32xf32, #tpu.memory_space<vmem>>, vector<2x32xf32>
    %1 = arith.truncf %0 : vector<2x32xf32> to vector<2x32xbf16>
    %c0_1 = arith.constant 0 : index
    %c0_2 = arith.constant 0 : index
    %2 = vector.load %arg2[%c0_1, %c0_2] : memref<32x128xbf16, #tpu.memory_space<vmem>>, vector<32x128xbf16>
    %cst = arith.constant dense<0.000000e+00> : vector<2x128xf32>
    %3 = tpu.matmul %1, %2, %cst {dimension_numbers = #tpu.dot_dimension_numbers<[1], [0], [0], [1], [0, 0, 1, 1], [], []>} : vector<2x32xbf16>, vector<32x128xbf16>, vector<2x128xf32> -> vector<2x128xf32>
    %c0_3 = arith.constant 0 : index
    %c0_4 = arith.constant 0 : index
    %4 = vector.load %arg3[%c0_3, %c0_4] : memref<1x128xf32, #tpu.memory_space<vmem>>, vector<1x128xf32>
    %5 = vector.broadcast %4 : vector<1x128xf32> to vector<2x128xf32>
    %6 = arith.addf %3, %5 : vector<2x128xf32>
    %cst_5 = arith.constant 0.000000e+00 : f32
    %7 = vector.broadcast %cst_5 : f32 to vector<2x128xf32>
    %8 = arith.maximumf %6, %7 : vector<2x128xf32>
    %c0_6 = arith.constant 0 : index
    %c0_7 = arith.constant 0 : index
    %9 = vector.load %arg4[%c0_6, %c0_7] : memref<1x128xf32, #tpu.memory_space<vmem>>, vector<1x128xf32>
    %10 = vector.broadcast %9 : vector<1x128xf32> to vector<2x128xf32>
    %11 = arith.mulf %8, %10 : vector<2x128xf32>
    %cst_8 = arith.constant dense<0.000000e+00> : vector<2xf32>
    %12 = vector.multi_reduction <add>, %11, %cst_8 [1] : vector<2x128xf32> to vector<2xf32>
    %c0_9 = arith.constant 0 : index
    %c0_10 = arith.constant 0 : index
    %13 = memref.load %arg5[%c0_9, %c0_10] : memref<1x1xf32, #tpu.memory_space<smem>>
    %14 = vector.broadcast %13 : f32 to vector<2xf32>
    %15 = arith.addf %12, %14 : vector<2xf32>
    %16 = arith.negf %15 : vector<2xf32>
    %17 = math.exp %16 : vector<2xf32>
    %cst_11 = arith.constant 1.000000e+00 : f32
    %18 = vector.broadcast %cst_11 : f32 to vector<2xf32>
    %19 = arith.addf %18, %17 : vector<2xf32>
    %20 = arith.divf %18, %19 : vector<2xf32>
    %21 = vector.shape_cast %20 : vector<2xf32> to vector<1x2xf32>
    %c0_12 = arith.constant 0 : index
    %c0_13 = arith.constant 0 : index
    %22 = vector.load %arg6[%c0_12, %c0_13] : memref<1x2xf32, #tpu.memory_space<vmem>>, vector<1x2xf32>
    tpu.vector_store %arg6[%c0_12, %c0_13], %21 {strides = array<i32>} : memref<1x2xf32, #tpu.memory_space<vmem>>, vector<1x2xf32>,
    return
  }
  func.func @transform_0(%arg0: i32) -> (i32, i32) {
    %c0_i32 = arith.constant 0 : i32
    %c0_i32_0 = arith.constant 0 : i32
    return %arg0, %c0_i32 : i32, i32
  }
  func.func @transform_1(%arg0: i32) -> (i32, i32) {
    %c0_i32 = arith.constant 0 : i32
    %c0_i32_0 = arith.constant 0 : i32
    %c0_i32_1 = arith.constant 0 : i32
    return %c0_i32, %c0_i32_0 : i32, i32
  }
  func.func @transform_2(%arg0: i32) -> (i32, i32) {
    %c0_i32 = arith.constant 0 : i32
    %c0_i32_0 = arith.constant 0 : i32
    %c0_i32_1 = arith.constant 0 : i32
    return %c0_i32, %c0_i32_0 : i32, i32
  }
  func.func @transform_3(%arg0: i32) -> (i32, i32) {
    %c0_i32 = arith.constant 0 : i32
    %c0_i32_0 = arith.constant 0 : i32
    %c0_i32_1 = arith.constant 0 : i32
    return %c0_i32, %c0_i32_0 : i32, i32
  }
  func.func @transform_4(%arg0: i32) -> (i32, i32) {
    %c0_i32 = arith.constant 0 : i32
    %c0_i32_0 = arith.constant 0 : i32
    %c0_i32_1 = arith.constant 0 : i32
    return %c0_i32, %c0_i32_0 : i32, i32
  }
  func.func @transform_5(%arg0: i32) -> (i32, i32) {
    %c0_i32 = arith.constant 0 : i32
    %c0_i32_0 = arith.constant 0 : i32
    return %c0_i32, %arg0 : i32, i32
  }
}

module attributes {stable_mosaic.version = 11 : i64} {
  func.func @_mlp_density_kernel(%arg0: i32, %arg1: memref<2x32xf32, #tpu.memory_space<vmem>>, %arg2: memref<32x128xbf16, #tpu.memory_space<vmem>>, %arg3: memref<1x128xf32, #tpu.memory_space<vmem>>, %arg4: memref<1x128xf32, #tpu.memory_space<vmem>>, %arg5: memref<1x1xf32, #tpu.memory_space<smem>>, %arg6: memref<1x2xf32, #tpu.memory_space<vmem>>) attributes {dimension_semantics = [#tpu.dimension_semantics<parallel>], iteration_bounds = array<i64: 1>, scalar_prefetch = 0 : i64, scratch_operands = 0 : i64, tpu.core_type = #tpu.core_type<tc>, window_params = [{transform_indices = @transform_0, window_bounds = array<i64: 2, 32>}, {pipeline_mode = #tpu.pipeline_mode<synchronous>, transform_indices = @transform_1, window_bounds = array<i64: 32, 128>}, {pipeline_mode = #tpu.pipeline_mode<synchronous>, transform_indices = @transform_2, window_bounds = array<i64: 1, 128>}, {pipeline_mode = #tpu.pipeline_mode<synchronous>, transform_indices = @transform_3, window_bounds = array<i64: 1, 128>}, {transform_indices = @transform_4, window_bounds = array<i64: 1, 1>}, {transform_indices = @transform_5, window_bounds = array<i64: 1, 2>}]} {
    %c0 = arith.constant 0 : index
    %c0_0 = arith.constant 0 : index
    %0 = vector.load %arg1[%c0, %c0_0] : memref<2x32xf32, #tpu.memory_space<vmem>>, vector<2x32xf32>
    %1 = arith.truncf %0 : vector<2x32xf32> to vector<2x32xbf16>
    %c0_1 = arith.constant 0 : index
    %c0_2 = arith.constant 0 : index
    %2 = vector.load %arg2[%c0_1, %c0_2] : memref<32x128xbf16, #tpu.memory_space<vmem>>, vector<32x128xbf16>
    %cst = arith.constant dense<0.000000e+00> : vector<2x128xf32>
    %3 = tpu.matmul %1, %2, %cst {dimension_numbers = #tpu.dot_dimension_numbers<[1], [0], [0], [1], [0, 0, 1, 1], [], []>} : vector<2x32xbf16>, vector<32x128xbf16>, vector<2x128xf32> -> vector<2x128xf32>
    %c0_3 = arith.constant 0 : index
    %c0_4 = arith.constant 0 : index
    %4 = vector.load %arg3[%c0_3, %c0_4] : memref<1x128xf32, #tpu.memory_space<vmem>>, vector<1x128xf32>
    %5 = vector.broadcast %4 : vector<1x128xf32> to vector<2x128xf32>
    %6 = arith.addf %3, %5 : vector<2x128xf32>
    %cst_5 = arith.constant 0.000000e+00 : f32
    %7 = vector.broadcast %cst_5 : f32 to vector<2x128xf32>
    %8 = arith.maximumf %6, %7 : vector<2x128xf32>
    %c0_6 = arith.constant 0 : index
    %c0_7 = arith.constant 0 : index
    %9 = vector.load %arg4[%c0_6, %c0_7] : memref<1x128xf32, #tpu.memory_space<vmem>>, vector<1x128xf32>
    %10 = vector.broadcast %9 : vector<1x128xf32> to vector<2x128xf32>
    %11 = arith.mulf %8, %10 : vector<2x128xf32>
    %cst_8 = arith.constant dense<0.000000e+00> : vector<2xf32>
    %12 = vector.multi_reduction <add>, %11, %cst_8 [1] : vector<2x128xf32> to vector<2xf32>
    %c0_9 = arith.constant 0 : index
    %c0_10 = arith.constant 0 : index
    %13 = memref.load %arg5[%c0_9, %c0_10] : memref<1x1xf32, #tpu.memory_space<smem>>
    %14 = vector.broadcast %13 : f32 to vector<2xf32>
    %15 = arith.addf %12, %14 : vector<2xf32>
    %16 = arith.negf %15 : vector<2xf32>
    %17 = math.exp %16 : vector<2xf32>
    %cst_11 = arith.constant 1.000000e+00 : f32
    %18 = vector.broadcast %cst_11 : f32 to vector<2xf32>
    %19 = arith.addf %18, %17 : vector<2xf32>
    %20 = arith.divf %18, %19 : vector<2xf32>
    %21 = vector.shape_cast %20 : vector<2xf32> to vector<1x2xf32>
    %c0_12 = arith.constant 0 : index
    %c0_13 = arith.constant 0 : index
    %22 = vector.load %arg6[%c0_12, %c0_13] : memref<1x2xf32, #tpu.memory_space<vmem>>, vector<1x2xf32>
    tpu.vector_store %arg6[%c0_12, %c0_13], %21 {strides = array<i32>} : memref<1x2xf32, #tpu.memory_space<vmem>>, vector<1x2xf32>,
    return
  }
  func.func @transform_0(%arg0: i32) -> (i32, i32) {
    %c0_i32 = arith.constant 0 : i32
    %c0_i32_0 = arith.constant 0 : i32
    return %arg0, %c0_i32 : i32, i32
  }
  func.func @transform_1(%arg0: i32) -> (i32, i32) {
    %c0_i32 = arith.constant 0 : i32
    %c0_i32_0 = arith.constant 0 : i32
    %c0_i32_1 = arith.constant 0 : i32
    return %c0_i32, %c0_i32_0 : i32, i32
  }
  func.func @transform_2(%arg0: i32) -> (i32, i32) {
    %c0_i32 = arith.constant 0 : i32
    %c0_i32_0 = arith.constant 0 : i32
    %c0_i32_1 = arith.constant 0 : i32
    return %c0_i32, %c0_i32_0 : i32, i32
  }
  func.func @transform_3(%arg0: i32) -> (i32, i32) {
    %c0_i32 = arith.constant 0 : i32
    %c0_i32_0 = arith.constant 0 : i32
    %c0_i32_1 = arith.constant 0 : i32
    return %c0_i32, %c0_i32_0 : i32, i32
  }
  func.func @transform_4(%arg0: i32) -> (i32, i32) {
    %c0_i32 = arith.constant 0 : i32
    %c0_i32_0 = arith.constant 0 : i32
    %c0_i32_1 = arith.constant 0 : i32
    return %c0_i32, %c0_i32_0 : i32, i32
  }
  func.func @transform_5(%arg0: i32) -> (i32, i32) {
    %c0_i32 = arith.constant 0 : i32
    %c0_i32_0 = arith.constant 0 : i32
    return %c0_i32, %arg0 : i32, i32
  }
}

</mosaic_0001>

<llo_original>
// kernel: tpu_custom_call.1
$region0: #{tpu_custom_call.1}
  #allocation0 [shape = 'u32[]', space=smem, size = 0x4, offset = 0x4, fixed_abs, tag = 'smem constant byte address 0x4 - core index']
  #allocation1 [shape = 'u32[72,128]{1,0:T(1,128)}', space=vmem, size = 0x9000, scoped, tag = 'internal scratch']
  #allocation2 [shape = 'f32[1,1]{1,0:T(1,128)S(6)}', space=smem, size = 0x200, scoped, tag = 'scoped memory for tpu_custom_call.1']
  %s0 = inlined_call_operand.vmem [shape: f32[2,32], index: 0, kind: input, shape index: {}]
  %s1 = inlined_call_operand.hbm [shape: bf16[32,128], index: 1, kind: input, shape index: {}]
  %s2 = inlined_call_operand.vmem [shape: f32[1,128], index: 2, kind: input, shape index: {}]
  %s3 = inlined_call_operand.vmem [shape: f32[1,128], index: 3, kind: input, shape index: {}]
  %s4 = inlined_call_operand.<no memory space> [shape: f32[1,1], index: 4, kind: input, shape index: {}]
  %s5 = inlined_call_operand.hbm [shape: f32[1,2], index: 5, kind: output, shape index: {}]
  %s6 = sld [smem:[#allocation0]]
  $region34: #{tpu_custom_call.1} parent=0
    _
  %s8 = ssub.s32 1, %s6
  %s9 = scalar_select 0, %s8, %s6
  %10 = sst [smem:[#allocation2]] %s4
  $region1: #{tpu_custom_call.1} parent=0
    #allocation3 [shape = 'u8[8192]{0}', space=vmem, size = 0x2000, scoped, tag = 'input window, operand 1, single buffered']
    #allocation4 [shape = 's32[1]{0}', space=sflag, size = 0x4, scoped, tag = 'scoped memory for tpu_custom_call.1']
    #allocation5 [shape = 's32[1]{0}', space=sflag, size = 0x4, scoped, tag = 'scoped memory for tpu_custom_call.1']
    #allocation6 [shape = 'u8[512]{0}', space=vmem, size = 0x400, scoped, tag = 'output window, operand 0, single buffered']
    %11 = vsyncpa [#allocation4], 0
    %12 = vsyncpa [#allocation5], 0
    // Predicated region
    $region2: #{tpu_custom_call.1} parent=1 // pred_check
      _
    $region3: #{tpu_custom_call.1} parent=1 // pred_check_branch
      %14 = sbr.rel (0) target = $region5
    $region4: #{tpu_custom_call.1} parent=1 // pred_region
      _
    $region5: #{tpu_custom_call.1} parent=1 // pred_fallthru
      _
    // Predicated region
    $region6: #{tpu_custom_call.1} parent=1 // pred_check
      _
    $region7: #{tpu_custom_call.1} parent=1 // pred_check_branch
      %16 = sbr.rel (0) target = $region9
    $region8: #{tpu_custom_call.1} parent=1 // pred_region
      %18 = vsyncadd [#allocation4], 0
      %s19 = sshll.u32 %s1, 4
      %s20 = int_to_ptr.hbm [resolvable:$true] %s19
      %s21 = sshll.u32 [#allocation3], 4
      %s22 = int_to_ptr.vmem [resolvable:$true] %s21
      %27 = dma.hbm_to_vmem [thread:$0]  %s20, 256, %s22, [#allocation4], 64, 64, 4
    $region9: #{tpu_custom_call.1} parent=1 // pred_fallthru
      _
    // Predicated region
    $region10: #{tpu_custom_call.1} parent=1 // pred_check
      _
    $region11: #{tpu_custom_call.1} parent=1 // pred_check_branch
      %29 = sbr.rel (0) target = $region13
    $region12: #{tpu_custom_call.1} parent=1 // pred_region
      _
    $region13: #{tpu_custom_call.1} parent=1 // pred_fallthru
      _
    // Predicated region
    $region14: #{tpu_custom_call.1} parent=1 // pred_check
      _
    $region15: #{tpu_custom_call.1} parent=1 // pred_check_branch
      %31 = sbr.rel (0) target = $region17
    $region16: #{tpu_custom_call.1} parent=1 // pred_region
      _
    $region17: #{tpu_custom_call.1} parent=1 // pred_fallthru
      _
    // Predicated region
    $region18: #{tpu_custom_call.1} parent=1 // pred_check
      _
    $region19: #{tpu_custom_call.1} parent=1 // pred_check_branch
      %33 = sbr.rel (0) target = $region21
    $region20: #{tpu_custom_call.1} parent=1 // pred_region
      _
    $region21: #{tpu_custom_call.1} parent=1 // pred_fallthru
      _
    // Predicated region
    $region22: #{tpu_custom_call.1} parent=1 // pred_check
      _
    $region23: #{tpu_custom_call.1} parent=1 // pred_check_branch
      %35 = sbr.rel (0) target = $region25
    $region24: #{tpu_custom_call.1} parent=1 // pred_region
      %37 = dma.done [#allocation4], 256
    $region25: #{tpu_custom_call.1} parent=1 // pred_fallthru
      _
    %v39 = vld [vmem:[%s0] sm:$0x3]
    %v40 = vpack.c.bf16 %v39, %v39
    %v41 = vld [vmem:[#allocation3] sm:$0xf]
    %v42 = vld [vmem:[#allocation3 + $0x4] sm:$0xf]
    %v43 = vld [vmem:[#allocation3 + $0x8] sm:$0xf]
    %v44 = vld [vmem:[#allocation3 + $0xc] sm:$0xf]
    %v45 = vld [vmem:[%s2] sm:$0x1]
    %v47 = vperm.slane %v45, 0
    %v53 = vunpack.c.l.b16 %v41
    %v54 = vunpack.c.l.b16 %v42
    %v55 = vunpack.c.l.b16 %v43
    %v56 = vunpack.c.l.b16 %v44
    %v57 = vpack.c.b16 %v54, %v53
    %v58 = vpack.c.b16 %v56, %v55
    %vm61 = vcmask 261120
    %v63 = vsel %vm61, %v40, 0
    %65 = vmatpush.bf16.msra.mxu0 0
    %66 = vmatpush.bf16.msra.mxu0 0
    %67 = vmatpush.bf16.msra.mxu0 0
    %68 = vmatpush.bf16.msra.mxu0 0
    %69 = vmatpush.bf16.msra.mxu0 0
    %70 = vmatpush.bf16.msra.mxu0 0
    %71 = vmatpush.bf16.msra.mxu0 %v58
    %72 = vmatpush.bf16.msra.mxu0 %v57
    %73 = vmatmul.bf16.gmra.mxu0 %v63
    %v74 = vpop.f32.mrf.mxu0
    %v75 = vadd.f32 %v47, %v74
    %v76 = vpop.f32.mrf.mxu0
    %77 = vdwg.mxu0
    %v78 = vmax.f32 %v75, 0.0
    %v79 = vld [vmem:[%s3] sm:$0x1]
    %v81 = vperm.slane %v79, 0
    %v83 = vmul.f32 %v78, %v81
    %vm84 = vcmask 1041408
    %v85 = vsel %vm84, %v83, 0.0
    %86 = vadd.xlane.f32.xlu0 %v85
    %v87 = vpop.xlane.xlu0 %86
    %s88 = sld [smem:[#allocation2]]
    %v89 = vstv %s88
    %v90 = vadd.f32 %v87, %v89
    %v91 = vxor.u32 %v90, 2147483648
    %v92 = vmul.f32 %v91, 1.442695
    %v93 = vpow.pop %v92
    %v94 = vadd.f32 %v93, 1.0
    %v95 = vrcp.pop %v94
    %v96 = vmul.f32 %v94, %v95
    %v97 = vsub.f32 1.0, %v96
    %v98 = vmul.f32 %v95, %v97
    %v99 = vadd.f32 %v95, %v98
    %vm100 = vweird.f32 %v94
    %vm101 = vweird.f32 %v95
    %vm102 = vmor %vm100, %vm101
    %v103 = vsel %vm102, %v95, %v99
    %v104 = vand.u32 2147483647, %v94
    %vm105 = vcmp.eq.f32.partialorder %v104, 8.507059e+37
    %v106 = vand.u32 %v94, 2147483648
    %v107 = vor.u32 1.1754944e-38, %v106
    %v108 = vsel %vm105, %v107, %v103
    %v109 = vmul.f32 1.0, %v108
    %v111 = vlaneseq
    %v112 = vand.u32 %v111, 127
    %v113 = vperm.slane %v109, %v112
    %vm115 = vcmask 8192
    %116 = vst.msk [vmem:[#allocation6] sm:$0x1] %vm115, %v113
    // Predicated region
    $region26: #{tpu_custom_call.1} parent=1 // pred_check
      _
    $region27: #{tpu_custom_call.1} parent=1 // pred_check_branch
      %118 = sbr.rel (0) target = $region29
    $region28: #{tpu_custom_call.1} parent=1 // pred_region
      %120 = vsyncadd [#allocation5], 0
      %s122 = sshll.u32 [#allocation6], 4
      %s123 = int_to_ptr.vmem [resolvable:$true] %s122
      %s124 = sshll.u32 %s5, 4
      %s125 = int_to_ptr.hbm [resolvable:$true] %s124
      %127 = dma.vmem_to_hbm [thread:$0]  %s123, 16, %s125, [#allocation5]
    $region29: #{tpu_custom_call.1} parent=1 // pred_fallthru
      _
    // Predicated region
    $region30: #{tpu_custom_call.1} parent=1 // pred_check
      _
    $region31: #{tpu_custom_call.1} parent=1 // pred_check_branch
      %129 = sbr.rel (0) target = $region33
    $region32: #{tpu_custom_call.1} parent=1 // pred_region
      %131 = dma.done [#allocation5], 16
    $region33: #{tpu_custom_call.1} parent=1 // pred_fallthru
      _
    %132 = vsyncpa [#allocation4], 1
    %133 = vsyncpa [#allocation5], 1

// kernel: tpu_custom_call.1
$region0: #{tpu_custom_call.1}
  #allocation0 [shape = 'u32[]', space=smem, size = 0x4, offset = 0x4, fixed_abs, tag = 'smem constant byte address 0x4 - core index']
  #allocation1 [shape = 'u32[72,128]{1,0:T(1,128)}', space=vmem, size = 0x9000, scoped, tag = 'internal scratch']
  #allocation2 [shape = 'f32[1,1]{1,0:T(1,128)S(6)}', space=smem, size = 0x200, scoped, tag = 'scoped memory for tpu_custom_call.1']
  %s0 = inlined_call_operand.vmem [shape: f32[2,32], index: 0, kind: input, shape index: {}]
  %s1 = inlined_call_operand.hbm [shape: bf16[32,128], index: 1, kind: input, shape index: {}]
  %s2 = inlined_call_operand.vmem [shape: f32[1,128], index: 2, kind: input, shape index: {}]
  %s3 = inlined_call_operand.vmem [shape: f32[1,128], index: 3, kind: input, shape index: {}]
  %s4 = inlined_call_operand.<no memory space> [shape: f32[1,1], index: 4, kind: input, shape index: {}]
  %s5 = inlined_call_operand.hbm [shape: f32[1,2], index: 5, kind: output, shape index: {}]
  %s6 = sld [smem:[#allocation0]]
  $region34: #{tpu_custom_call.1} parent=0
    _
  %s8 = ssub.s32 1, %s6
  %s9 = scalar_select 0, %s8, %s6
  %10 = sst [smem:[#allocation2]] %s4
  $region1: #{tpu_custom_call.1} parent=0
    #allocation3 [shape = 'u8[8192]{0}', space=vmem, size = 0x2000, scoped, tag = 'input window, operand 1, single buffered']
    #allocation4 [shape = 's32[1]{0}', space=sflag, size = 0x4, scoped, tag = 'scoped memory for tpu_custom_call.1']
    #allocation5 [shape = 's32[1]{0}', space=sflag, size = 0x4, scoped, tag = 'scoped memory for tpu_custom_call.1']
    #allocation6 [shape = 'u8[512]{0}', space=vmem, size = 0x400, scoped, tag = 'output window, operand 0, single buffered']
    %11 = vsyncpa [#allocation4], 0
    %12 = vsyncpa [#allocation5], 0
    // Predicated region
    $region2: #{tpu_custom_call.1} parent=1 // pred_check
      _
    $region3: #{tpu_custom_call.1} parent=1 // pred_check_branch
      %14 = sbr.rel (0) target = $region5
    $region4: #{tpu_custom_call.1} parent=1 // pred_region
      _
    $region5: #{tpu_custom_call.1} parent=1 // pred_fallthru
      _
    // Predicated region
    $region6: #{tpu_custom_call.1} parent=1 // pred_check
      _
    $region7: #{tpu_custom_call.1} parent=1 // pred_check_branch
      %16 = sbr.rel (0) target = $region9
    $region8: #{tpu_custom_call.1} parent=1 // pred_region
      %18 = vsyncadd [#allocation4], 0
      %s19 = sshll.u32 %s1, 4
      %s20 = int_to_ptr.hbm [resolvable:$true] %s19
      %s21 = sshll.u32 [#allocation3], 4
      %s22 = int_to_ptr.vmem [resolvable:$true] %s21
      %27 = dma.hbm_to_vmem [thread:$0]  %s20, 256, %s22, [#allocation4], 64, 64, 4
    $region9: #{tpu_custom_call.1} parent=1 // pred_fallthru
      _
    // Predicated region
    $region10: #{tpu_custom_call.1} parent=1 // pred_check
      _
    $region11: #{tpu_custom_call.1} parent=1 // pred_check_branch
      %29 = sbr.rel (0) target = $region13
    $region12: #{tpu_custom_call.1} parent=1 // pred_region
      _
    $region13: #{tpu_custom_call.1} parent=1 // pred_fallthru
      _
    // Predicated region
    $region14: #{tpu_custom_call.1} parent=1 // pred_check
      _
    $region15: #{tpu_custom_call.1} parent=1 // pred_check_branch
      %31 = sbr.rel (0) target = $region17
    $region16: #{tpu_custom_call.1} parent=1 // pred_region
      _
    $region17: #{tpu_custom_call.1} parent=1 // pred_fallthru
      _
    // Predicated region
    $region18: #{tpu_custom_call.1} parent=1 // pred_check
      _
    $region19: #{tpu_custom_call.1} parent=1 // pred_check_branch
      %33 = sbr.rel (0) target = $region21
    $region20: #{tpu_custom_call.1} parent=1 // pred_region
      _
    $region21: #{tpu_custom_call.1} parent=1 // pred_fallthru
      _
    // Predicated region
    $region22: #{tpu_custom_call.1} parent=1 // pred_check
      _
    $region23: #{tpu_custom_call.1} parent=1 // pred_check_branch
      %35 = sbr.rel (0) target = $region25
    $region24: #{tpu_custom_call.1} parent=1 // pred_region
      %37 = dma.done [#allocation4], 256
    $region25: #{tpu_custom_call.1} parent=1 // pred_fallthru
      _
    %v39 = vld [vmem:[%s0] sm:$0x3]
    %v40 = vpack.c.bf16 %v39, %v39
    %v41 = vld [vmem:[#allocation3] sm:$0xf]
    %v42 = vld [vmem:[#allocation3 + $0x4] sm:$0xf]
    %v43 = vld [vmem:[#allocation3 + $0x8] sm:$0xf]
    %v44 = vld [vmem:[#allocation3 + $0xc] sm:$0xf]
    %v45 = vld [vmem:[%s2] sm:$0x1]
    %v47 = vperm.slane %v45, 0
    %v53 = vunpack.c.l.b16 %v41
    %v54 = vunpack.c.l.b16 %v42
    %v55 = vunpack.c.l.b16 %v43
    %v56 = vunpack.c.l.b16 %v44
    %v57 = vpack.c.b16 %v54, %v53
    %v58 = vpack.c.b16 %v56, %v55
    %vm61 = vcmask 261120
    %v63 = vsel %vm61, %v40, 0
    %65 = vmatpush.bf16.msra.mxu0 0
    %66 = vmatpush.bf16.msra.mxu0 0
    %67 = vmatpush.bf16.msra.mxu0 0
    %68 = vmatpush.bf16.msra.mxu0 0
    %69 = vmatpush.bf16.msra.mxu0 0
    %70 = vmatpush.bf16.msra.mxu0 0
    %71 = vmatpush.bf16.msra.mxu0 %v58
    %72 = vmatpush.bf16.msra.mxu0 %v57
    %73 = vmatmul.bf16.gmra.mxu0 %v63
    %v74 = vpop.f32.mrf.mxu0
    %v75 = vadd.f32 %v47, %v74
    %v76 = vpop.f32.mrf.mxu0
    %77 = vdwg.mxu0
    %v78 = vmax.f32 %v75, 0.0
    %v79 = vld [vmem:[%s3] sm:$0x1]
    %v81 = vperm.slane %v79, 0
    %v83 = vmul.f32 %v78, %v81
    %vm84 = vcmask 1041408
    %v85 = vsel %vm84, %v83, 0.0
    %86 = vadd.xlane.f32.xlu0 %v85
    %v87 = vpop.xlane.xlu0 %86
    %s88 = sld [smem:[#allocation2]]
    %v89 = vstv %s88
    %v90 = vadd.f32 %v87, %v89
    %v91 = vxor.u32 %v90, 2147483648
    %v92 = vmul.f32 %v91, 1.442695
    %v93 = vpow.pop %v92
    %v94 = vadd.f32 %v93, 1.0
    %v95 = vrcp.pop %v94
    %v96 = vmul.f32 %v94, %v95
    %v97 = vsub.f32 1.0, %v96
    %v98 = vmul.f32 %v95, %v97
    %v99 = vadd.f32 %v95, %v98
    %vm100 = vweird.f32 %v94
    %vm101 = vweird.f32 %v95
    %vm102 = vmor %vm100, %vm101
    %v103 = vsel %vm102, %v95, %v99
    %v104 = vand.u32 2147483647, %v94
    %vm105 = vcmp.eq.f32.partialorder %v104, 8.507059e+37
    %v106 = vand.u32 %v94, 2147483648
    %v107 = vor.u32 1.1754944e-38, %v106
    %v108 = vsel %vm105, %v107, %v103
    %v109 = vmul.f32 1.0, %v108
    %v111 = vlaneseq
    %v112 = vand.u32 %v111, 127
    %v113 = vperm.slane %v109, %v112
    %vm115 = vcmask 8192
    %116 = vst.msk [vmem:[#allocation6] sm:$0x1] %vm115, %v113
    // Predicated region
    $region26: #{tpu_custom_call.1} parent=1 // pred_check
      _
    $region27: #{tpu_custom_call.1} parent=1 // pred_check_branch
      %118 = sbr.rel (0) target = $region29
    $region28: #{tpu_custom_call.1} parent=1 // pred_region
      %120 = vsyncadd [#allocation5], 0
      %s122 = sshll.u32 [#allocation6], 4
      %s123 = int_to_ptr.vmem [resolvable:$true] %s122
      %s124 = sshll.u32 %s5, 4
      %s125 = int_to_ptr.hbm [resolvable:$true] %s124
      %127 = dma.vmem_to_hbm [thread:$0]  %s123, 16, %s125, [#allocation5]
    $region29: #{tpu_custom_call.1} parent=1 // pred_fallthru
      _
    // Predicated region
    $region30: #{tpu_custom_call.1} parent=1 // pred_check
      _
    $region31: #{tpu_custom_call.1} parent=1 // pred_check_branch
      %129 = sbr.rel (0) target = $region33
    $region32: #{tpu_custom_call.1} parent=1 // pred_region
      %131 = dma.done [#allocation5], 16
    $region33: #{tpu_custom_call.1} parent=1 // pred_fallthru
      _
    %132 = vsyncpa [#allocation4], 1
    %133 = vsyncpa [#allocation5], 1

</llo_original>
